<compile_context>
chip_gen: v7x
topology: tpu7x:2x2x1
jax: 0.10.0
libtpu: 0.0.40
codegen_flags: <defaults>
</compile_context>

<pallas_src>
import functools

import jax
import jax.numpy as jnp
from jax.experimental import pallas as pl
from jax.experimental.pallas import tpu as pltpu  # noqa: F401  (TPU backend)

LANE_PAD = 128   # every channel dim padded to the 128-lane vreg width
NUM_VEC_ROWS = 16  # 9 packed vectors, padded to 16 sublanes

# packed-vector row indices
_GCN1_B, _FC1_B, _BN1_G, _BN1_B, _GCN2_B, _FC2_B, _BN2_G, _BN2_B, _LIN_B = range(9)
# packed-weight indices
_W_GCN1, _W_FC1, _W_GCN2, _W_FC2, _W_LIN = range(5)


# ----------------------------- fused Pallas kernel --------------------------

def _fused_gcn_kernel(adj_ref, x_ref, w_ref, v_ref, o_ref):
    n = adj_ref.shape[0]
    num_feat = x_ref.shape[1]
    inv_n = 1.0 / float(n)                       # static

    adj = adj_ref[...]                           # [N, N] f32 normalized adjacency
    x_bf = x_ref[...].astype(jnp.bfloat16)       # [N, F] bf16 (cast in-kernel)

    def vec(i):                                  # [1, 128] f32, static row
        return v_ref[i:i + 1, :]

    def gcn(x_bf16, w, b):
        # out = A_norm @ (x @ W) + b   (bf16 MXU inputs, f32 accumulation;
        # aggregation kept f32 to preserve the D^{-1/2} coefficients)
        h = jnp.dot(x_bf16, w, preferred_element_type=jnp.float32)
        agg = jnp.dot(adj, h, preferred_element_type=jnp.float32)
        return agg + b

    def linear_relu_bn(x_f32, w, b, g, beta):
        # batchnorm1d(relu(x @ W + b)) -- training-mode biased batch stats.
        y = jnp.dot(x_f32.astype(jnp.bfloat16), w,
                    preferred_element_type=jnp.float32) + b
        y = jnp.maximum(y, 0.0)
        # one-pass stats: two independent reductions (overlap in XLU/VPU slots)
        s1 = jnp.sum(y, axis=0, keepdims=True)
        s2 = jnp.sum(y * y, axis=0, keepdims=True)
        mean = s1 * inv_n
        var = jnp.maximum(s2 * inv_n - mean * mean, 0.0)   # guard cancellation
        y = (y - mean) * jax.lax.rsqrt(var + 1e-5)
        return y * g + beta

    # GCN1 (contract only the real feature rows of the padded weight)
    h = gcn(x_bf, w_ref[_W_GCN1, :num_feat, :], vec(_GCN1_B))
    # bn1(relu(fc1))
    h = linear_relu_bn(h, w_ref[_W_FC1], vec(_FC1_B), vec(_BN1_G), vec(_BN1_B))
    # GCN2
    h = gcn(h.astype(jnp.bfloat16), w_ref[_W_GCN2], vec(_GCN2_B))
    # bn2(relu(fc2))
    h = linear_relu_bn(h, w_ref[_W_FC2], vec(_FC2_B), vec(_BN2_G), vec(_BN2_B))
    # lin -> relu; dropout(p=0) is identity.  Lane-dense [N, 128] store.
    y = jnp.dot(h.astype(jnp.bfloat16), w_ref[_W_LIN],
                preferred_element_type=jnp.float32) + vec(_LIN_B)
    o_ref[...] = jnp.maximum(y, 0.0)


# ----------------------------- glue: packing / params -----------------------

def _full_spec(shape):
    # whole-array block resident in VMEM (everything here is tiny)
    return pl.BlockSpec(shape, lambda: tuple(0 for _ in shape))


def prepare_params(params):
    """One-time transform: transpose, pad to 128 lanes, cast, and PACK.

    Returns two arrays:
      "w": [5, 128, 128] bf16  -- gcn1, fc1, gcn2, fc2, lin weights ([in, out])
      "v": [16, 128]     f32   -- 9 bias/gamma/beta rows (rest zero)
    """
    def pad_mat_t(w_out_in):
        w = w_out_in.T.astype(jnp.bfloat16)            # [in, out]
        out = jnp.zeros((LANE_PAD, LANE_PAD), jnp.bfloat16)
        return out.at[:w.shape[0], :w.shape[1]].set(w)

    weights = jnp.stack([
        pad_mat_t(params["gcn1_w"]),
        pad_mat_t(params["fc1_w"]),
        pad_mat_t(params["gcn2_w"]),
        pad_mat_t(params["fc2_w"]),
        pad_mat_t(params["lin_w"]),
    ], axis=0)                                          # [5, 128, 128] bf16

    vec_list = [params["gcn1_b"], params["fc1_b"],
                params["bn1_g"], params["bn1_b"],
                params["gcn2_b"], params["fc2_b"],
                params["bn2_g"], params["bn2_b"],
                params["lin_b"]]
    vecs = jnp.zeros((NUM_VEC_ROWS, LANE_PAD), jnp.float32)
    for i, v in enumerate(vec_list):
        vecs = vecs.at[i, :v.shape[0]].set(v.astype(jnp.float32))

    return {"w": weights, "v": vecs}


def build_norm_adj(edge_index, num_nodes):
    """Dense D^{-1/2}(A+I)D^{-1/2} from edge_index [2, E] (src, dst), f32.

    Duplicate edges scatter-add (matching PyG aggregation); self-loops are only
    added for nodes that do not already have one (add_remaining_self_loops).
    Built once in glue and cached across forwards.  Kept in f32 for numerical
    agreement with a PyTorch f32 reference.
    """
    src, dst = edge_index[0], edge_index[1]
    adj = jnp.zeros((num_nodes, num_nodes), jnp.float32)
    adj = adj.at[dst, src].add(1.0)
    diag = jnp.diagonal(adj)
    adj = adj + jnp.diag(jnp.where(diag == 0, 1.0, 0.0))
    deg = jnp.sum(adj, axis=1)
    dinv = jnp.where(deg > 0, jax.lax.rsqrt(deg), 0.0)
    return dinv[:, None] * adj * dinv[None, :]


def init_params(key, num_features, out_features, hidden_dim):
    ks = jax.random.split(key, 10)
    s = 0.1

    def w(k, shape):
        return (s * jax.random.normal(k, shape)).astype(jnp.float32)

    return {
        "gcn1_w": w(ks[0], (hidden_dim, num_features)),   # torch [out, in]
        "gcn1_b": w(ks[1], (hidden_dim,)),
        "gcn2_w": w(ks[2], (hidden_dim, hidden_dim)),
        "gcn2_b": w(ks[3], (hidden_dim,)),
        "fc1_w": w(ks[4], (hidden_dim, hidden_dim)),
        "fc1_b": w(ks[5], (hidden_dim,)),
        "fc2_w": w(ks[6], (hidden_dim, hidden_dim)),
        "fc2_b": w(ks[7], (hidden_dim,)),
        "bn1_g": jnp.ones((hidden_dim,), jnp.float32),
        "bn1_b": jnp.zeros((hidden_dim,), jnp.float32),
        "bn2_g": jnp.ones((hidden_dim,), jnp.float32),
        "bn2_b": jnp.zeros((hidden_dim,), jnp.float32),
        "lin_w": w(ks[8], (out_features, hidden_dim)),
        "lin_b": w(ks[9], (out_features,)),
    }


# ----------------------------- forward --------------------------------------

@functools.partial(jax.jit, static_argnames=("out_features",))
def gcn_net_forward(prepped, adj_f32, x, *, out_features):
    n, f = x.shape

    # x goes in unpadded / uncast -- no wrapper-side prep ops at all.
    args = (adj_f32, x, prepped["w"], prepped["v"])

    flops = (2 * n * f * LANE_PAD                 # GCN1 xW
             + 2 * 2 * n * n * LANE_PAD           # 2x aggregation
             + 4 * 2 * n * LANE_PAD * LANE_PAD)   # fc1, GCN2 xW, fc2, lin
    bytes_accessed = (n * n * 4 + n * f * 4
                      + 5 * LANE_PAD * LANE_PAD * 2
                      + NUM_VEC_ROWS * LANE_PAD * 4
                      + n * LANE_PAD * 4)
    cost = pl.CostEstimate(flops=flops, transcendentals=2 * LANE_PAD,
                           bytes_accessed=bytes_accessed)

    out_pad = pl.pallas_call(
        _fused_gcn_kernel,
        out_shape=jax.ShapeDtypeStruct((n, LANE_PAD), jnp.float32),
        in_specs=[_full_spec(a.shape) for a in args],
        out_specs=_full_spec((n, LANE_PAD)),
        cost_estimate=cost,
    )(*args)

    # real output columns only (padded lanes are exactly zero)
    return out_pad[:, :out_features]


# ----------------------------- main ------------------------------------------

if __name__ == "__main__":
    num_nodes = 16
    num_features = 8
    hidden_dim = 32
    out_features = 4

    key = jax.random.PRNGKey(0)
    kx, kp = jax.random.split(key)

    x = jax.random.normal(kx, (num_nodes, num_features), jnp.float32)

    # deterministic bidirectional ring graph
    idx = jnp.arange(num_nodes, dtype=jnp.int32)
    nxt = (idx + 1) % num_nodes
    src = jnp.concatenate([idx, nxt])
    dst = jnp.concatenate([nxt, idx])
    edge_index = jnp.stack([src, dst], axis=0)   # [2, E], E = 32

    params = init_params(kp, num_features, out_features, hidden_dim)
    prepped = prepare_params(params)                       # once
    adj_f32 = build_norm_adj(edge_index, num_nodes)        # once, f32

    out = gcn_net_forward(prepped, adj_f32, x, out_features=out_features)
    out = jax.block_until_ready(out)
    assert out.shape == (num_nodes, out_features)
    assert bool(jnp.all(jnp.isfinite(out)))
    print("KERNEL_OK")
</pallas_src>

<mosaic_0001>
module attributes {stable_mosaic.version = 11 : i64} {
  func.func @_fused_gcn_kernel(%arg0: memref<16x16xf32, #tpu.memory_space<vmem>>, %arg1: memref<16x8xf32, #tpu.memory_space<vmem>>, %arg2: memref<5x128x128xbf16, #tpu.memory_space<vmem>>, %arg3: memref<16x128xf32, #tpu.memory_space<vmem>>, %arg4: memref<16x128xf32, #tpu.memory_space<vmem>>) attributes {dimension_semantics = [], scalar_prefetch = 0 : i64, scratch_operands = 0 : i64, tpu.core_type = #tpu.core_type<tc>} {
    %c0 = arith.constant 0 : index
    %c0_0 = arith.constant 0 : index
    %0 = vector.load %arg0[%c0, %c0_0] : memref<16x16xf32, #tpu.memory_space<vmem>>, vector<16x16xf32>
    %c0_1 = arith.constant 0 : index
    %c0_2 = arith.constant 0 : index
    %1 = vector.load %arg1[%c0_1, %c0_2] : memref<16x8xf32, #tpu.memory_space<vmem>>, vector<16x8xf32>
    %2 = arith.truncf %1 : vector<16x8xf32> to vector<16x8xbf16>
    %c0_3 = arith.constant 0 : index
    %c0_4 = arith.constant 0 : index
    %c0_5 = arith.constant 0 : index
    %3 = vector.load %arg2[%c0_3, %c0_4, %c0_5] : memref<5x128x128xbf16, #tpu.memory_space<vmem>>, vector<1x8x128xbf16>
    %4 = vector.shape_cast %3 : vector<1x8x128xbf16> to vector<8x128xbf16>
    %c0_6 = arith.constant 0 : index
    %c0_7 = arith.constant 0 : index
    %5 = vector.load %arg3[%c0_6, %c0_7] : memref<16x128xf32, #tpu.memory_space<vmem>>, vector<1x128xf32>
    %cst = arith.constant dense<0.000000e+00> : vector<16x128xf32>
    %6 = tpu.matmul %2, %4, %cst {dimension_numbers = #tpu.dot_dimension_numbers<[1], [0], [0], [1], [0, 0, 1, 1], [], []>} : vector<16x8xbf16>, vector<8x128xbf16>, vector<16x128xf32> -> vector<16x128xf32>
    %cst_8 = arith.constant dense<0.000000e+00> : vector<16x128xf32>
    %7 = tpu.matmul %0, %6, %cst_8 {dimension_numbers = #tpu.dot_dimension_numbers<[1], [0], [0], [1], [0, 0, 1, 1], [], []>} : vector<16x16xf32>, vector<16x128xf32>, vector<16x128xf32> -> vector<16x128xf32>
    %8 = vector.broadcast %5 : vector<1x128xf32> to vector<16x128xf32>
    %9 = arith.addf %7, %8 : vector<16x128xf32>
    %c1 = arith.constant 1 : index
    %c0_9 = arith.constant 0 : index
    %c0_10 = arith.constant 0 : index
    %10 = vector.load %arg2[%c1, %c0_9, %c0_10] : memref<5x128x128xbf16, #tpu.memory_space<vmem>>, vector<1x128x128xbf16>
    %11 = vector.shape_cast %10 : vector<1x128x128xbf16> to vector<128x128xbf16>
    %c1_11 = arith.constant 1 : index
    %c0_12 = arith.constant 0 : index
    %12 = vector.load %arg3[%c1_11, %c0_12] : memref<16x128xf32, #tpu.memory_space<vmem>>, vector<1x128xf32>
    %c2 = arith.constant 2 : index
    %c0_13 = arith.constant 0 : index
    %13 = vector.load %arg3[%c2, %c0_13] : memref<16x128xf32, #tpu.memory_space<vmem>>, vector<1x128xf32>
    %c3 = arith.constant 3 : index
    %c0_14 = arith.constant 0 : index
    %14 = vector.load %arg3[%c3, %c0_14] : memref<16x128xf32, #tpu.memory_space<vmem>>, vector<1x128xf32>
    %15 = arith.truncf %9 : vector<16x128xf32> to vector<16x128xbf16>
    %cst_15 = arith.constant dense<0.000000e+00> : vector<16x128xf32>
    %16 = tpu.matmul %15, %11, %cst_15 {dimension_numbers = #tpu.dot_dimension_numbers<[1], [0], [0], [1], [0, 0, 1, 1], [], []>} : vector<16x128xbf16>, vector<128x128xbf16>, vector<16x128xf32> -> vector<16x128xf32>
    %17 = vector.broadcast %12 : vector<1x128xf32> to vector<16x128xf32>
    %18 = arith.addf %16, %17 : vector<16x128xf32>
    %cst_16 = arith.constant 0.000000e+00 : f32
    %19 = vector.broadcast %cst_16 : f32 to vector<16x128xf32>
    %20 = arith.maximumf %18, %19 : vector<16x128xf32>
    %cst_17 = arith.constant dense<0.000000e+00> : vector<128xf32>
    %21 = vector.multi_reduction <add>, %20, %cst_17 [0] : vector<16x128xf32> to vector<128xf32>
    %22 = vector.shape_cast %21 : vector<128xf32> to vector<1x128xf32>
    %23 = arith.mulf %20, %20 : vector<16x128xf32>
    %cst_18 = arith.constant dense<0.000000e+00> : vector<128xf32>
    %24 = vector.multi_reduction <add>, %23, %cst_18 [0] : vector<16x128xf32> to vector<128xf32>
    %25 = vector.shape_cast %24 : vector<128xf32> to vector<1x128xf32>
    %cst_19 = arith.constant 6.250000e-02 : f32
    %26 = vector.broadcast %cst_19 : f32 to vector<1x128xf32>
    %27 = arith.mulf %22, %26 : vector<1x128xf32>
    %cst_20 = arith.constant 6.250000e-02 : f32
    %28 = vector.broadcast %cst_20 : f32 to vector<1x128xf32>
    %29 = arith.mulf %25, %28 : vector<1x128xf32>
    %30 = arith.mulf %27, %27 : vector<1x128xf32>
    %31 = arith.subf %29, %30 : vector<1x128xf32>
    %cst_21 = arith.constant 0.000000e+00 : f32
    %32 = vector.broadcast %cst_21 : f32 to vector<1x128xf32>
    %33 = arith.maximumf %31, %32 : vector<1x128xf32>
    %34 = vector.broadcast %27 : vector<1x128xf32> to vector<16x128xf32>
    %35 = arith.subf %20, %34 : vector<16x128xf32>
    %cst_22 = arith.constant 9.99999974E-6 : f32
    %36 = vector.broadcast %cst_22 : f32 to vector<1x128xf32>
    %37 = arith.addf %33, %36 : vector<1x128xf32>
    %38 = math.rsqrt %37 : vector<1x128xf32>
    %39 = vector.broadcast %38 : vector<1x128xf32> to vector<16x128xf32>
    %40 = arith.mulf %35, %39 : vector<16x128xf32>
    %41 = vector.broadcast %13 : vector<1x128xf32> to vector<16x128xf32>
    %42 = arith.mulf %40, %41 : vector<16x128xf32>
    %43 = vector.broadcast %14 : vector<1x128xf32> to vector<16x128xf32>
    %44 = arith.addf %42, %43 : vector<16x128xf32>
    %45 = arith.truncf %44 : vector<16x128xf32> to vector<16x128xbf16>
    %c2_23 = arith.constant 2 : index
    %c0_24 = arith.constant 0 : index
    %c0_25 = arith.constant 0 : index
    %46 = vector.load %arg2[%c2_23, %c0_24, %c0_25] : memref<5x128x128xbf16, #tpu.memory_space<vmem>>, vector<1x128x128xbf16>
    %47 = vector.shape_cast %46 : vector<1x128x128xbf16> to vector<128x128xbf16>
    %c4 = arith.constant 4 : index
    %c0_26 = arith.constant 0 : index
    %48 = vector.load %arg3[%c4, %c0_26] : memref<16x128xf32, #tpu.memory_space<vmem>>, vector<1x128xf32>
    %cst_27 = arith.constant dense<0.000000e+00> : vector<16x128xf32>
    %49 = tpu.matmul %45, %47, %cst_27 {dimension_numbers = #tpu.dot_dimension_numbers<[1], [0], [0], [1], [0, 0, 1, 1], [], []>} : vector<16x128xbf16>, vector<128x128xbf16>, vector<16x128xf32> -> vector<16x128xf32>
    %cst_28 = arith.constant dense<0.000000e+00> : vector<16x128xf32>
    %50 = tpu.matmul %0, %49, %cst_28 {dimension_numbers = #tpu.dot_dimension_numbers<[1], [0], [0], [1], [0, 0, 1, 1], [], []>} : vector<16x16xf32>, vector<16x128xf32>, vector<16x128xf32> -> vector<16x128xf32>
    %51 = vector.broadcast %48 : vector<1x128xf32> to vector<16x128xf32>
    %52 = arith.addf %50, %51 : vector<16x128xf32>
    %c3_29 = arith.constant 3 : index
    %c0_30 = arith.constant 0 : index
    %c0_31 = arith.constant 0 : index
    %53 = vector.load %arg2[%c3_29, %c0_30, %c0_31] : memref<5x128x128xbf16, #tpu.memory_space<vmem>>, vector<1x128x128xbf16>
    %54 = vector.shape_cast %53 : vector<1x128x128xbf16> to vector<128x128xbf16>
    %c5 = arith.constant 5 : index
    %c0_32 = arith.constant 0 : index
    %55 = vector.load %arg3[%c5, %c0_32] : memref<16x128xf32, #tpu.memory_space<vmem>>, vector<1x128xf32>
    %c6 = arith.constant 6 : index
    %c0_33 = arith.constant 0 : index
    %56 = vector.load %arg3[%c6, %c0_33] : memref<16x128xf32, #tpu.memory_space<vmem>>, vector<1x128xf32>
    %c7 = arith.constant 7 : index
    %c0_34 = arith.constant 0 : index
    %57 = vector.load %arg3[%c7, %c0_34] : memref<16x128xf32, #tpu.memory_space<vmem>>, vector<1x128xf32>
    %58 = arith.truncf %52 : vector<16x128xf32> to vector<16x128xbf16>
    %cst_35 = arith.constant dense<0.000000e+00> : vector<16x128xf32>
    %59 = tpu.matmul %58, %54, %cst_35 {dimension_numbers = #tpu.dot_dimension_numbers<[1], [0], [0], [1], [0, 0, 1, 1], [], []>} : vector<16x128xbf16>, vector<128x128xbf16>, vector<16x128xf32> -> vector<16x128xf32>
    %60 = vector.broadcast %55 : vector<1x128xf32> to vector<16x128xf32>
    %61 = arith.addf %59, %60 : vector<16x128xf32>
    %cst_36 = arith.constant 0.000000e+00 : f32
    %62 = vector.broadcast %cst_36 : f32 to vector<16x128xf32>
    %63 = arith.maximumf %61, %62 : vector<16x128xf32>
    %cst_37 = arith.constant dense<0.000000e+00> : vector<128xf32>
    %64 = vector.multi_reduction <add>, %63, %cst_37 [0] : vector<16x128xf32> to vector<128xf32>
    %65 = vector.shape_cast %64 : vector<128xf32> to vector<1x128xf32>
    %66 = arith.mulf %63, %63 : vector<16x128xf32>
    %cst_38 = arith.constant dense<0.000000e+00> : vector<128xf32>
    %67 = vector.multi_reduction <add>, %66, %cst_38 [0] : vector<16x128xf32> to vector<128xf32>
    %68 = vector.shape_cast %67 : vector<128xf32> to vector<1x128xf32>
    %cst_39 = arith.constant 6.250000e-02 : f32
    %69 = vector.broadcast %cst_39 : f32 to vector<1x128xf32>
    %70 = arith.mulf %65, %69 : vector<1x128xf32>
    %cst_40 = arith.constant 6.250000e-02 : f32
    %71 = vector.broadcast %cst_40 : f32 to vector<1x128xf32>
    %72 = arith.mulf %68, %71 : vector<1x128xf32>
    %73 = arith.mulf %70, %70 : vector<1x128xf32>
    %74 = arith.subf %72, %73 : vector<1x128xf32>
    %cst_41 = arith.constant 0.000000e+00 : f32
    %75 = vector.broadcast %cst_41 : f32 to vector<1x128xf32>
    %76 = arith.maximumf %74, %75 : vector<1x128xf32>
    %77 = vector.broadcast %70 : vector<1x128xf32> to vector<16x128xf32>
    %78 = arith.subf %63, %77 : vector<16x128xf32>
    %cst_42 = arith.constant 9.99999974E-6 : f32
    %79 = vector.broadcast %cst_42 : f32 to vector<1x128xf32>
    %80 = arith.addf %76, %79 : vector<1x128xf32>
    %81 = math.rsqrt %80 : vector<1x128xf32>
    %82 = vector.broadcast %81 : vector<1x128xf32> to vector<16x128xf32>
    %83 = arith.mulf %78, %82 : vector<16x128xf32>
    %84 = vector.broadcast %56 : vector<1x128xf32> to vector<16x128xf32>
    %85 = arith.mulf %83, %84 : vector<16x128xf32>
    %86 = vector.broadcast %57 : vector<1x128xf32> to vector<16x128xf32>
    %87 = arith.addf %85, %86 : vector<16x128xf32>
    %88 = arith.truncf %87 : vector<16x128xf32> to vector<16x128xbf16>
    %c4_43 = arith.constant 4 : index
    %c0_44 = arith.constant 0 : index
    %c0_45 = arith.constant 0 : index
    %89 = vector.load %arg2[%c4_43, %c0_44, %c0_45] : memref<5x128x128xbf16, #tpu.memory_space<vmem>>, vector<1x128x128xbf16>
    %90 = vector.shape_cast %89 : vector<1x128x128xbf16> to vector<128x128xbf16>
    %cst_46 = arith.constant dense<0.000000e+00> : vector<16x128xf32>
    %91 = tpu.matmul %88, %90, %cst_46 {dimension_numbers = #tpu.dot_dimension_numbers<[1], [0], [0], [1], [0, 0, 1, 1], [], []>} : vector<16x128xbf16>, vector<128x128xbf16>, vector<16x128xf32> -> vector<16x128xf32>
    %c8 = arith.constant 8 : index
    %c0_47 = arith.constant 0 : index
    %92 = vector.load %arg3[%c8, %c0_47] : memref<16x128xf32, #tpu.memory_space<vmem>>, vector<1x128xf32>
    %93 = vector.broadcast %92 : vector<1x128xf32> to vector<16x128xf32>
    %94 = arith.addf %91, %93 : vector<16x128xf32>
    %cst_48 = arith.constant 0.000000e+00 : f32
    %95 = vector.broadcast %cst_48 : f32 to vector<16x128xf32>
    %96 = arith.maximumf %94, %95 : vector<16x128xf32>
    %c0_49 = arith.constant 0 : index
    %c0_50 = arith.constant 0 : index
    %97 = vector.load %arg4[%c0_49, %c0_50] : memref<16x128xf32, #tpu.memory_space<vmem>>, vector<16x128xf32>
    tpu.vector_store %arg4[%c0_49, %c0_50], %96 {strides = array<i32>} : memref<16x128xf32, #tpu.memory_space<vmem>>, vector<16x128xf32>,
    return
  }
}

</mosaic_0001>

<llo_original>
// kernel: gcn_net_forward.1
$region0: #{gcn_net_forward.1}
  #allocation0 [shape = 'u32[]', space=smem, size = 0x4, offset = 0x4, fixed_abs, tag = 'smem constant byte address 0x4 - core index']
  #allocation1 [shape = 'u32[144,128]{1,0:T(1,128)}', space=vmem, size = 0x12000, scoped, tag = 'internal scratch']
  %s0 = inlined_call_operand.vmem [shape: f32[16,16], index: 0, kind: input, shape index: {}]
  %s1 = inlined_call_operand.vmem [shape: f32[16,8], index: 1, kind: input, shape index: {}]
  %s2 = inlined_call_operand.hbm [shape: bf16[5,128,128], index: 2, kind: input, shape index: {}]
  %s3 = inlined_call_operand.hbm [shape: f32[16,128], index: 3, kind: input, shape index: {}]
  %s4 = inlined_call_operand.vmem [shape: f32[16,128], index: 4, kind: output, shape index: {}]
  %s5 = sld [smem:[#allocation0]]
  $region34: #{gcn_net_forward.1} parent=0
    _
  %s7 = ssub.s32 1, %s5
  %s8 = scalar_select 0, %s7, %s5
  $region1: #{gcn_net_forward.1} parent=0
    #allocation2 [shape = 'u8[163840]{0}', space=vmem, size = 0x28000, scoped, tag = 'input window, operand 2, single buffered']
    #allocation3 [shape = 's32[1]{0}', space=sflag, size = 0x4, scoped, tag = 'scoped memory for gcn_net_forward.1']
    #allocation4 [shape = 'u8[8192]{0}', space=vmem, size = 0x2000, scoped, tag = 'input window, operand 3, single buffered']
    #allocation5 [shape = 's32[1]{0}', space=sflag, size = 0x4, scoped, tag = 'scoped memory for gcn_net_forward.1']
    %9 = vsyncpa [#allocation3], 0
    %10 = vsyncpa [#allocation5], 0
    // Predicated region
    $region2: #{gcn_net_forward.1} parent=1 // pred_check
      _
    $region3: #{gcn_net_forward.1} parent=1 // pred_check_branch
      %12 = sbr.rel (0) target = $region5
    $region4: #{gcn_net_forward.1} parent=1 // pred_region
      _
    $region5: #{gcn_net_forward.1} parent=1 // pred_fallthru
      _
    // Predicated region
    $region6: #{gcn_net_forward.1} parent=1 // pred_check
      _
    $region7: #{gcn_net_forward.1} parent=1 // pred_check_branch
      %14 = sbr.rel (0) target = $region9
    $region8: #{gcn_net_forward.1} parent=1 // pred_region
      _
    $region9: #{gcn_net_forward.1} parent=1 // pred_fallthru
      _
    // Predicated region
    $region10: #{gcn_net_forward.1} parent=1 // pred_check
      _
    $region11: #{gcn_net_forward.1} parent=1 // pred_check_branch
      %16 = sbr.rel (0) target = $region13
    $region12: #{gcn_net_forward.1} parent=1 // pred_region
      %s18 = ssub.s32 5120, 5120
      %19 = vsyncadd [#allocation3], %s18
      %s20 = sshll.u32 [#allocation2], 4
      %s21 = int_to_ptr.vmem [resolvable:$true] %s20
      %26 = dma.hbm_to_vmem [thread:$0]  %s2, 5120, %s21, [#allocation3], 64, 64, 4
    $region13: #{gcn_net_forward.1} parent=1 // pred_fallthru
      _
    // Predicated region
    $region14: #{gcn_net_forward.1} parent=1 // pred_check
      _
    $region15: #{gcn_net_forward.1} parent=1 // pred_check_branch
      %28 = sbr.rel (0) target = $region17
    $region16: #{gcn_net_forward.1} parent=1 // pred_region
      %s30 = ssub.s32 256, 256
      %31 = vsyncadd [#allocation5], %s30
      %s32 = sshll.u32 [#allocation4], 4
      %s33 = int_to_ptr.vmem [resolvable:$true] %s32
      %38 = dma.hbm_to_vmem [thread:$0]  %s3, 256, %s33, [#allocation5], 128, 128, 8
    $region17: #{gcn_net_forward.1} parent=1 // pred_fallthru
      _
    // Predicated region
    $region18: #{gcn_net_forward.1} parent=1 // pred_check
      _
    $region19: #{gcn_net_forward.1} parent=1 // pred_check_branch
      %40 = sbr.rel (0) target = $region21
    $region20: #{gcn_net_forward.1} parent=1 // pred_region
      %41 = dma.done [#allocation3], 5120
    $region21: #{gcn_net_forward.1} parent=1 // pred_fallthru
      _
    // Predicated region
    $region22: #{gcn_net_forward.1} parent=1 // pred_check
      _
    $region23: #{gcn_net_forward.1} parent=1 // pred_check_branch
      %43 = sbr.rel (0) target = $region25
    $region24: #{gcn_net_forward.1} parent=1 // pred_region
      %44 = dma.done [#allocation5], 256
    $region25: #{gcn_net_forward.1} parent=1 // pred_fallthru
      _
    %v46 = vld [vmem:[%s0] sm:$0xff]
    %v47 = vld [vmem:[%s0 + $0x8] sm:$0xff]
    %v48 = vld [vmem:[%s1] sm:$0xff]
    %v49 = vld [vmem:[%s1 + $0x8] sm:$0xff]
    %v50 = vpack.c.bf16 %v49, %v48
    %v51 = vld [vmem:[#allocation2] sm:$0xf]
    %v52 = vld [vmem:[#allocation4] sm:$0x1]
    %vm53 = vcmask 64512
    %v55 = vsel %vm53, %v50, 0
    %vm57 = vcmask 1043456
    %v59 = vsel %vm57, %v51, 0
    %61 = vmatprep.subr.bf16.mxu0 0
    %62 = vmatpush1.bf16.msra.mxu0 %v59
    %63 = vmatprep.subr.bf16.mxu0 0
    %64 = vmatpush1.bf16.msra.mxu0 0
    %65 = vmatprep.subr.bf16.mxu0 0
    %66 = vmatpush1.bf16.msra.mxu0 0
    %67 = vmatprep.subr.bf16.mxu0 0
    %68 = vmatpush1.bf16.msra.mxu0 0
    %69 = vmatprep.subr.bf16.mxu0 0
    %70 = vmatpush1.bf16.msra.mxu0 0
    %71 = vmatprep.subr.bf16.mxu0 0
    %72 = vmatpush1.bf16.msra.mxu0 0
    %73 = vmatprep.subr.bf16.mxu0 0
    %74 = vmatpush1.bf16.msra.mxu0 0
    %75 = vmatprep.subr.bf16.mxu0 0
    %76 = vmatpush1.bf16.msra.mxu0 0
    %77 = vmatprep.subr.bf16.mxu0 0
    %78 = vmatpush1.bf16.msra.mxu0 0
    %79 = vmatprep.subr.bf16.mxu0 0
    %80 = vmatpush1.bf16.msra.mxu0 0
    %81 = vmatprep.subr.bf16.mxu0 0
    %82 = vmatpush1.bf16.msra.mxu0 0
    %83 = vmatprep.subr.bf16.mxu0 0
    %84 = vmatpush1.bf16.msra.mxu0 0
    %85 = vmatprep.subr.bf16.mxu0 0
    %86 = vmatpush1.bf16.msra.mxu0 0
    %87 = vmatprep.subr.bf16.mxu0 0
    %88 = vmatpush1.bf16.msra.mxu0 0
    %89 = vmatprep.subr.bf16.mxu0 0
    %90 = vmatpush1.bf16.msra.mxu0 0
    %91 = vmatprep.subr.bf16.mxu0 0
    %92 = vmatpush1.bf16.msra.mxu0 0
    %93 = vmatprep.mubr.bf16.mxu0 0
    %94 = vmatmul.mubr.bf16.gmra.mrb[0].mxu0 %v55
    %v95 = vpop.f32.mrb[0].mxu0
    %v96 = vadd.f32 0.0, %v95
    %v97 = vpop.f32.mrb[0].mxu0
    %v98 = vpop.f32.mrb[0].mxu0
    %v99 = vadd.f32 0.0, %v98
    %v100 = vpop.f32.mrb[0].mxu0
    %101 = vdwg.mxu0
    %v102 = vlaneseq
    %v103 = vshrl.u32 %v102, 7
    %v104 = vsub.s32 0, %v103
    %v105 = vrot.slane %v52, %v104
    %vm106 = vcmask 130048
    %v108 = vsel %vm106, %v46, 0
    %v111 = vsel %vm106, %v47, 0
    %113 = vmatprep.subr.mxu0 0.0
    %114 = vmatpush1.msra.mxu0 %v96
    %115 = vmatprep.subr.mxu0 0.0
    %116 = vmatpush1.msra.mxu0 %v99
    %117 = vmatprep.subr.mxu0 0.0
    %118 = vmatpush1.msra.mxu0 0.0
    %119 = vmatprep.subr.mxu0 0.0
    %120 = vmatpush1.msra.mxu0 0.0
    %121 = vmatprep.subr.mxu0 0.0
    %122 = vmatpush1.msra.mxu0 0.0
    %123 = vmatprep.subr.mxu0 0.0
    %124 = vmatpush1.msra.mxu0 0.0
    %125 = vmatprep.subr.mxu0 0.0
    %126 = vmatpush1.msra.mxu0 0.0
    %127 = vmatprep.subr.mxu0 0.0
    %128 = vmatpush1.msra.mxu0 0.0
    %129 = vmatprep.subr.mxu0 0.0
    %130 = vmatpush1.msra.mxu0 0.0
    %131 = vmatprep.subr.mxu0 0.0
    %132 = vmatpush1.msra.mxu0 0.0
    %133 = vmatprep.subr.mxu0 0.0
    %134 = vmatpush1.msra.mxu0 0.0
    %135 = vmatprep.subr.mxu0 0.0
    %136 = vmatpush1.msra.mxu0 0.0
    %137 = vmatprep.subr.mxu0 0.0
    %138 = vmatpush1.msra.mxu0 0.0
    %139 = vmatprep.subr.mxu0 0.0
    %140 = vmatpush1.msra.mxu0 0.0
    %141 = vmatprep.subr.mxu0 0.0
    %142 = vmatpush1.msra.mxu0 0.0
    %143 = vmatprep.subr.mxu0 0.0
    %144 = vmatpush1.msra.mxu0 0.0
    %145 = vmatprep.subr.mxu0 0.0
    %146 = vmatpush1.msra.mxu0 0.0
    %147 = vmatprep.subr.mxu0 0.0
    %148 = vmatpush1.msra.mxu0 0.0
    %149 = vmatprep.subr.mxu0 0.0
    %150 = vmatpush1.msra.mxu0 0.0
    %151 = vmatprep.subr.mxu0 0.0
    %152 = vmatpush1.msra.mxu0 0.0
    %153 = vmatprep.subr.mxu0 0.0
    %154 = vmatpush1.msra.mxu0 0.0
    %155 = vmatprep.subr.mxu0 0.0
    %156 = vmatpush1.msra.mxu0 0.0
    %157 = vmatprep.subr.mxu0 0.0
    %158 = vmatpush1.msra.mxu0 0.0
    %159 = vmatprep.subr.mxu0 0.0
    %160 = vmatpush1.msra.mxu0 0.0
    %161 = vmatprep.subr.mxu0 0.0
    %162 = vmatpush1.msra.mxu0 0.0
    %163 = vmatprep.subr.mxu0 0.0
    %164 = vmatpush1.msra.mxu0 0.0
    %165 = vmatprep.subr.mxu0 0.0
    %166 = vmatpush1.msra.mxu0 0.0
    %167 = vmatprep.subr.mxu0 0.0
    %168 = vmatpush1.msra.mxu0 0.0
    %169 = vmatprep.subr.mxu0 0.0
    %170 = vmatpush1.msra.mxu0 0.0
    %171 = vmatprep.subr.mxu0 0.0
    %172 = vmatpush1.msra.mxu0 0.0
    %173 = vmatprep.subr.mxu0 0.0
    %174 = vmatpush1.msra.mxu0 0.0
    %175 = vmatprep.subr.mxu0 0.0
    %176 = vmatpush1.msra.mxu0 0.0
    %177 = vmatprep.mubr.f32.mxu0 0.0
    %178 = vmatmul.mubr.f32.gmra.mrb[0].mxu0 %v108
    %v179 = vpop.f32.mrb[0].mxu0
    %v180 = vadd.f32 %v105, %v179
    %v181 = vpop.f32.mrb[0].mxu0
    %182 = vmatprep.mubr.f32.mxu0 0.0
    %183 = vmatmul.mubr.f32.gmra.mrb[0].mxu0 %v111
    %v184 = vpop.f32.mrb[0].mxu0
    %v185 = vadd.f32 %v105, %v184
    %v186 = vpop.f32.mrb[0].mxu0
    %187 = vdwg.mxu0
    %s188 = scalar_lea.vmem [#allocation2], 64
    %v189 = vld [vmem:[%s188] sm:$0xf]
    %v190 = vld [vmem:[%s188 + $0x4] sm:$0xf]
    %v191 = vld [vmem:[%s188 + $0x8] sm:$0xf]
    %v192 = vld [vmem:[%s188 + $0xc] sm:$0xf]
    %v193 = vld [vmem:[%s188 + $0x10] sm:$0xf]
    %v194 = vld [vmem:[%s188 + $0x14] sm:$0xf]
    %v195 = vld [vmem:[%s188 + $0x18] sm:$0xf]
    %v196 = vld [vmem:[%s188 + $0x1c] sm:$0xf]
    %v197 = vld [vmem:[%s188 + $0x20] sm:$0xf]
    %v198 = vld [vmem:[%s188 + $0x24] sm:$0xf]
    %v199 = vld [vmem:[%s188 + $0x28] sm:$0xf]
    %v200 = vld [vmem:[%s188 + $0x2c] sm:$0xf]
    %v201 = vld [vmem:[%s188 + $0x30] sm:$0xf]
    %v202 = vld [vmem:[%s188 + $0x34] sm:$0xf]
    %v203 = vld [vmem:[%s188 + $0x38] sm:$0xf]
    %v204 = vld [vmem:[%s188 + $0x3c] sm:$0xf]
    %v205 = vld [vmem:[#allocation4 + $0x1] sm:$0x1]
    %v206 = vld [vmem:[#allocation4 + $0x2] sm:$0x1]
    %v207 = vld [vmem:[#allocation4 + $0x3] sm:$0x1]
    %v208 = vpack.c.bf16 %v185, %v180
    %v209 = vlaneseq
    %v210 = vshrl.u32 %v209, 7
    %v211 = vsub.s32 0, %v210
    %v212 = vrot.slane %v205, %v211
    %v229 = vunpack.c.l.b16 %v189
    %v230 = vunpack.c.l.b16 %v190
    %v231 = vunpack.c.l.b16 %v191
    %v232 = vunpack.c.l.b16 %v192
    %v233 = vunpack.c.l.b16 %v193
    %v234 = vunpack.c.l.b16 %v194
    %v235 = vunpack.c.l.b16 %v195
    %v236 = vunpack.c.l.b16 %v196
    %v237 = vunpack.c.l.b16 %v197
    %v238 = vunpack.c.l.b16 %v198
    %v239 = vunpack.c.l.b16 %v199
    %v240 = vunpack.c.l.b16 %v200
    %v241 = vunpack.c.l.b16 %v201
    %v242 = vunpack.c.l.b16 %v202
    %v243 = vunpack.c.l.b16 %v203
    %v244 = vunpack.c.l.b16 %v204
    %v245 = vpack.c.b16 %v230, %v229
    %v246 = vpack.c.b16 %v232, %v231
    %v247 = vpack.c.b16 %v234, %v233
    %v248 = vpack.c.b16 %v236, %v235
    %v249 = vpack.c.b16 %v238, %v237
    %v250 = vpack.c.b16 %v240, %v239
    %v251 = vpack.c.b16 %v242, %v241
    %v252 = vpack.c.b16 %v244, %v243
    %261 = vmatprep.subr.bf16.mxu0 0
    %262 = vmatpush1.bf16.msra.mxu0 %v245
    %263 = vmatprep.subr.bf16.mxu0 0
    %264 = vmatpush1.bf16.msra.mxu0 %v246
    %265 = vmatprep.subr.bf16.mxu0 0
    %266 = vmatpush1.bf16.msra.mxu0 %v247
    %267 = vmatprep.subr.bf16.mxu0 0
    %268 = vmatpush1.bf16.msra.mxu0 %v248
    %269 = vmatprep.subr.bf16.mxu0 0
    %270 = vmatpush1.bf16.msra.mxu0 %v249
    %271 = vmatprep.subr.bf16.mxu0 0
    %272 = vmatpush1.bf16.msra.mxu0 %v250
    %273 = vmatprep.subr.bf16.mxu0 0
    %274 = vmatpush1.bf16.msra.mxu0 %v251
    %275 = vmatprep.subr.bf16.mxu0 0
    %276 = vmatpush1.bf16.msra.mxu0 %v252
    %277 = vmatprep.subr.bf16.mxu0 0
    %278 = vmatpush1.bf16.msra.mxu0 0
    %279 = vmatprep.subr.bf16.mxu0 0
    %280 = vmatpush1.bf16.msra.mxu0 0
    %281 = vmatprep.subr.bf16.mxu0 0
    %282 = vmatpush1.bf16.msra.mxu0 0
    %283 = vmatprep.subr.bf16.mxu0 0
    %284 = vmatpush1.bf16.msra.mxu0 0
    %285 = vmatprep.subr.bf16.mxu0 0
    %286 = vmatpush1.bf16.msra.mxu0 0
    %287 = vmatprep.subr.bf16.mxu0 0
    %288 = vmatpush1.bf16.msra.mxu0 0
    %289 = vmatprep.subr.bf16.mxu0 0
    %290 = vmatpush1.bf16.msra.mxu0 0
    %291 = vmatprep.subr.bf16.mxu0 0
    %292 = vmatpush1.bf16.msra.mxu0 0
    %293 = vmatprep.mubr.bf16.mxu0 0
    %294 = vmatmul.mubr.bf16.gmra.mrb[0].mxu0 %v208
    %v295 = vpop.f32.mrb[0].mxu0
    %v296 = vadd.f32 %v212, %v295
    %v297 = vpop.f32.mrb[0].mxu0
    %v298 = vpop.f32.mrb[0].mxu0
    %v299 = vadd.f32 %v212, %v298
    %v300 = vpop.f32.mrb[0].mxu0
    %301 = vdwg.mxu0
    %v302 = vmax.f32 %v296, 0.0
    %v303 = vmax.f32 %v299, 0.0
    %v304 = vadd.f32 %v302, %v303
    %v305 = vrot.slane %v304, 4
    %v306 = vadd.f32 %v304, %v305
    %v307 = vrot.slane %v306, 2
    %v308 = vadd.f32 %v306, %v307
    %v309 = vrot.slane %v308, 1
    %v310 = vadd.f32 %v308, %v309
    %v311 = vmul.f32 %v302, %v302
    %v312 = vmul.f32 %v303, %v303
    %v313 = vadd.f32 %v311, %v312
    %v314 = vrot.slane %v313, 4
    %v315 = vadd.f32 %v313, %v314
    %v316 = vrot.slane %v315, 2
    %v317 = vadd.f32 %v315, %v316
    %v318 = vrot.slane %v317, 1
    %v319 = vadd.f32 %v317, %v318
    %v320 = vmul.f32 %v310, 0.0625
    %v321 = vmul.f32 %v319, 0.0625
    %v322 = vmul.f32 %v320, %v320
    %v323 = vsub.f32 %v321, %v322
    %v324 = vmax.f32 %v323, 0.0
    %v325 = vsub.f32 %v302, %v320
    %v326 = vsub.f32 %v303, %v320
    %v327 = vadd.f32 %v324, 1e-05
    %v328 = vrsqrt.pop %v327
    %v329 = vmul.f32 %v325, %v328
    %v330 = vmul.f32 %v326, %v328
    %v331 = vlaneseq
    %v332 = vshrl.u32 %v331, 7
    %v333 = vsub.s32 0, %v332
    %v334 = vrot.slane %v206, %v333
    %v335 = vmul.f32 %v329, %v334
    %v336 = vmul.f32 %v330, %v334
    %v337 = vlaneseq
    %v338 = vshrl.u32 %v337, 7
    %v339 = vsub.s32 0, %v338
    %v340 = vrot.slane %v207, %v339
    %v341 = vadd.f32 %v335, %v340
    %v342 = vadd.f32 %v336, %v340
    %v343 = vpack.c.bf16 %v342, %v341
    %s344 = scalar_lea.vmem [#allocation2], 128
    %v345 = vld [vmem:[%s344] sm:$0xf]
    %v346 = vld [vmem:[%s344 + $0x4] sm:$0xf]
    %v347 = vld [vmem:[%s344 + $0x8] sm:$0xf]
    %v348 = vld [vmem:[%s344 + $0xc] sm:$0xf]
    %v349 = vld [vmem:[%s344 + $0x10] sm:$0xf]
    %v350 = vld [vmem:[%s344 + $0x14] sm:$0xf]
    %v351 = vld [vmem:[%s344 + $0x18] sm:$0xf]
    %v352 = vld [vmem:[%s344 + $0x1c] sm:$0xf]
    %v353 = vld [vmem:[%s344 + $0x20] sm:$0xf]
    %v354 = vld [vmem:[%s344 + $0x24] sm:$0xf]
    %v355 = vld [vmem:[%s344 + $0x28] sm:$0xf]
    %v356 = vld [vmem:[%s344 + $0x2c] sm:$0xf]
    %v357 = vld [vmem:[%s344 + $0x30] sm:$0xf]
    %v358 = vld [vmem:[%s344 + $0x34] sm:$0xf]
    %v359 = vld [vmem:[%s344 + $0x38] sm:$0xf]
    %v360 = vld [vmem:[%s344 + $0x3c] sm:$0xf]
    %v361 = vld [vmem:[#allocation4 + $0x4] sm:$0x1]
    %v378 = vunpack.c.l.b16 %v345
    %v379 = vunpack.c.l.b16 %v346
    %v380 = vunpack.c.l.b16 %v347
    %v381 = vunpack.c.l.b16 %v348
    %v382 = vunpack.c.l.b16 %v349
    %v383 = vunpack.c.l.b16 %v350
    %v384 = vunpack.c.l.b16 %v351
    %v385 = vunpack.c.l.b16 %v352
    %v386 = vunpack.c.l.b16 %v353
    %v387 = vunpack.c.l.b16 %v354
    %v388 = vunpack.c.l.b16 %v355
    %v389 = vunpack.c.l.b16 %v356
    %v390 = vunpack.c.l.b16 %v357
    %v391 = vunpack.c.l.b16 %v358
    %v392 = vunpack.c.l.b16 %v359
    %v393 = vunpack.c.l.b16 %v360
    %v394 = vpack.c.b16 %v379, %v378
    %v395 = vpack.c.b16 %v381, %v380
    %v396 = vpack.c.b16 %v383, %v382
    %v397 = vpack.c.b16 %v385, %v384
    %v398 = vpack.c.b16 %v387, %v386
    %v399 = vpack.c.b16 %v389, %v388
    %v400 = vpack.c.b16 %v391, %v390
    %v401 = vpack.c.b16 %v393, %v392
    %410 = vmatprep.subr.bf16.mxu0 0
    %411 = vmatpush1.bf16.msra.mxu0 %v394
    %412 = vmatprep.subr.bf16.mxu0 0
    %413 = vmatpush1.bf16.msra.mxu0 %v395
    %414 = vmatprep.subr.bf16.mxu0 0
    %415 = vmatpush1.bf16.msra.mxu0 %v396
    %416 = vmatprep.subr.bf16.mxu0 0
    %417 = vmatpush1.bf16.msra.mxu0 %v397
    %418 = vmatprep.subr.bf16.mxu0 0
    %419 = vmatpush1.bf16.msra.mxu0 %v398
    %420 = vmatprep.subr.bf16.mxu0 0
    %421 = vmatpush1.bf16.msra.mxu0 %v399
    %422 = vmatprep.subr.bf16.mxu0 0
    %423 = vmatpush1.bf16.msra.mxu0 %v400
    %424 = vmatprep.subr.bf16.mxu0 0
    %425 = vmatpush1.bf16.msra.mxu0 %v401
    %426 = vmatprep.subr.bf16.mxu0 0
    %427 = vmatpush1.bf16.msra.mxu0 0
    %428 = vmatprep.subr.bf16.mxu0 0
    %429 = vmatpush1.bf16.msra.mxu0 0
    %430 = vmatprep.subr.bf16.mxu0 0
    %431 = vmatpush1.bf16.msra.mxu0 0
    %432 = vmatprep.subr.bf16.mxu0 0
    %433 = vmatpush1.bf16.msra.mxu0 0
    %434 = vmatprep.subr.bf16.mxu0 0
    %435 = vmatpush1.bf16.msra.mxu0 0
    %436 = vmatprep.subr.bf16.mxu0 0
    %437 = vmatpush1.bf16.msra.mxu0 0
    %438 = vmatprep.subr.bf16.mxu0 0
    %439 = vmatpush1.bf16.msra.mxu0 0
    %440 = vmatprep.subr.bf16.mxu0 0
    %441 = vmatpush1.bf16.msra.mxu0 0
    %442 = vmatprep.mubr.bf16.mxu0 0
    %443 = vmatmul.mubr.bf16.gmra.mrb[0].mxu0 %v343
    %v444 = vpop.f32.mrb[0].mxu0
    %v445 = vadd.f32 0.0, %v444
    %v446 = vpop.f32.mrb[0].mxu0
    %v447 = vpop.f32.mrb[0].mxu0
    %v448 = vadd.f32 0.0, %v447
    %v449 = vpop.f32.mrb[0].mxu0
    %450 = vdwg.mxu0
    %v451 = vlaneseq
    %v452 = vshrl.u32 %v451, 7
    %v453 = vsub.s32 0, %v452
    %v454 = vrot.slane %v361, %v453
    %455 = vmatprep.subr.mxu0 0.0
    %456 = vmatpush1.msra.mxu0 %v445
    %457 = vmatprep.subr.mxu0 0.0
    %458 = vmatpush1.msra.mxu0 %v448
    %459 = vmatprep.subr.mxu0 0.0
    %460 = vmatpush1.msra.mxu0 0.0
    %461 = vmatprep.subr.mxu0 0.0
    %462 = vmatpush1.msra.mxu0 0.0
    %463 = vmatprep.subr.mxu0 0.0
    %464 = vmatpush1.msra.mxu0 0.0
    %465 = vmatprep.subr.mxu0 0.0
    %466 = vmatpush1.msra.mxu0 0.0
    %467 = vmatprep.subr.mxu0 0.0
    %468 = vmatpush1.msra.mxu0 0.0
    %469 = vmatprep.subr.mxu0 0.0
    %470 = vmatpush1.msra.mxu0 0.0
    %471 = vmatprep.subr.mxu0 0.0
    %472 = vmatpush1.msra.mxu0 0.0
    %473 = vmatprep.subr.mxu0 0.0
    %474 = vmatpush1.msra.mxu0 0.0
    %475 = vmatprep.subr.mxu0 0.0
    %476 = vmatpush1.msra.mxu0 0.0
    %477 = vmatprep.subr.mxu0 0.0
    %478 = vmatpush1.msra.mxu0 0.0
    %479 = vmatprep.subr.mxu0 0.0
    %480 = vmatpush1.msra.mxu0 0.0
    %481 = vmatprep.subr.mxu0 0.0
    %482 = vmatpush1.msra.mxu0 0.0
    %483 = vmatprep.subr.mxu0 0.0
    %484 = vmatpush1.msra.mxu0 0.0
    %485 = vmatprep.subr.mxu0 0.0
    %486 = vmatpush1.msra.mxu0 0.0
    %487 = vmatprep.subr.mxu0 0.0
    %488 = vmatpush1.msra.mxu0 0.0
    %489 = vmatprep.subr.mxu0 0.0
    %490 = vmatpush1.msra.mxu0 0.0
    %491 = vmatprep.subr.mxu0 0.0
    %492 = vmatpush1.msra.mxu0 0.0
    %493 = vmatprep.subr.mxu0 0.0
    %494 = vmatpush1.msra.mxu0 0.0
    %495 = vmatprep.subr.mxu0 0.0
    %496 = vmatpush1.msra.mxu0 0.0
    %497 = vmatprep.subr.mxu0 0.0
    %498 = vmatpush1.msra.mxu0 0.0
    %499 = vmatprep.subr.mxu0 0.0
    %500 = vmatpush1.msra.mxu0 0.0
    %501 = vmatprep.subr.mxu0 0.0
    %502 = vmatpush1.msra.mxu0 0.0
    %503 = vmatprep.subr.mxu0 0.0
    %504 = vmatpush1.msra.mxu0 0.0
    %505 = vmatprep.subr.mxu0 0.0
    %506 = vmatpush1.msra.mxu0 0.0
    %507 = vmatprep.subr.mxu0 0.0
    %508 = vmatpush1.msra.mxu0 0.0
    %509 = vmatprep.subr.mxu0 0.0
    %510 = vmatpush1.msra.mxu0 0.0
    %511 = vmatprep.subr.mxu0 0.0
    %512 = vmatpush1.msra.mxu0 0.0
    %513 = vmatprep.subr.mxu0 0.0
    %514 = vmatpush1.msra.mxu0 0.0
    %515 = vmatprep.subr.mxu0 0.0
    %516 = vmatpush1.msra.mxu0 0.0
    %517 = vmatprep.subr.mxu0 0.0
    %518 = vmatpush1.msra.mxu0 0.0
    %519 = vmatprep.mubr.f32.mxu0 0.0
    %520 = vmatmul.mubr.f32.gmra.mrb[0].mxu0 %v108
    %v521 = vpop.f32.mrb[0].mxu0
    %v522 = vadd.f32 %v454, %v521
    %v523 = vpop.f32.mrb[0].mxu0
    %524 = vmatprep.mubr.f32.mxu0 0.0
    %525 = vmatmul.mubr.f32.gmra.mrb[0].mxu0 %v111
    %v526 = vpop.f32.mrb[0].mxu0
    %v527 = vadd.f32 %v454, %v526
    %v528 = vpop.f32.mrb[0].mxu0
    %529 = vdwg.mxu0
    %s530 = scalar_lea.vmem [#allocation2], 192
    %v531 = vld [vmem:[%s530] sm:$0xf]
    %v532 = vld [vmem:[%s530 + $0x4] sm:$0xf]
    %v533 = vld [vmem:[%s530 + $0x8] sm:$0xf]
    %v534 = vld [vmem:[%s530 + $0xc] sm:$0xf]
    %v535 = vld [vmem:[%s530 + $0x10] sm:$0xf]
    %v536 = vld [vmem:[%s530 + $0x14] sm:$0xf]
    %v537 = vld [vmem:[%s530 + $0x18] sm:$0xf]
    %v538 = vld [vmem:[%s530 + $0x1c] sm:$0xf]
    %v539 = vld [vmem:[%s530 + $0x20] sm:$0xf]
    %v540 = vld [vmem:[%s530 + $0x24] sm:$0xf]
    %v541 = vld [vmem:[%s530 + $0x28] sm:$0xf]
    %v542 = vld [vmem:[%s530 + $0x2c] sm:$0xf]
    %v543 = vld [vmem:[%s530 + $0x30] sm:$0xf]
    %v544 = vld [vmem:[%s530 + $0x34] sm:$0xf]
    %v545 = vld [vmem:[%s530 + $0x38] sm:$0xf]
    %v546 = vld [vmem:[%s530 + $0x3c] sm:$0xf]
    %v547 = vld [vmem:[#allocation4 + $0x5] sm:$0x1]
    %v548 = vld [vmem:[#allocation4 + $0x6] sm:$0x1]
    %v549 = vld [vmem:[#allocation4 + $0x7] sm:$0x1]
    %v550 = vpack.c.bf16 %v527, %v522
    %v551 = vlaneseq
    %v552 = vshrl.u32 %v551, 7
    %v553 = vsub.s32 0, %v552
    %v554 = vrot.slane %v547, %v553
    %v571 = vunpack.c.l.b16 %v531
    %v572 = vunpack.c.l.b16 %v532
    %v573 = vunpack.c.l.b16 %v533
    %v574 = vunpack.c.l.b16 %v534
    %v575 = vunpack.c.l.b16 %v535
    %v576 = vunpack.c.l.b16 %v536
    %v577 = vunpack.c.l.b16 %v537
    %v578 = vunpack.c.l.b16 %v538
    %v579 = vunpack.c.l.b16 %v539
    %v580 = vunpack.c.l.b16 %v540
    %v581 = vunpack.c.l.b16 %v541
    %v582 = vunpack.c.l.b16 %v542
    %v583 = vunpack.c.l.b16 %v543
    %v584 = vunpack.c.l.b16 %v544
    %v585 = vunpack.c.l.b16 %v545
    %v586 = vunpack.c.l.b16 %v546
    %v587 = vpack.c.b16 %v572, %v571
    %v588 = vpack.c.b16 %v574, %v573
    %v589 = vpack.c.b16 %v576, %v575
    %v590 = vpack.c.b16 %v578, %v577
    %v591 = vpack.c.b16 %v580, %v579
    %v592 = vpack.c.b16 %v582, %v581
    %v593 = vpack.c.b16 %v584, %v583
    %v594 = vpack.c.b16 %v586, %v585
    %603 = vmatprep.subr.bf16.mxu0 0
    %604 = vmatpush1.bf16.msra.mxu0 %v587
    %605 = vmatprep.subr.bf16.mxu0 0
    %606 = vmatpush1.bf16.msra.mxu0 %v588
    %607 = vmatprep.subr.bf16.mxu0 0
    %608 = vmatpush1.bf16.msra.mxu0 %v589
    %609 = vmatprep.subr.bf16.mxu0 0
    %610 = vmatpush1.bf16.msra.mxu0 %v590
    %611 = vmatprep.subr.bf16.mxu0 0
    %612 = vmatpush1.bf16.msra.mxu0 %v591
    %613 = vmatprep.subr.bf16.mxu0 0
    %614 = vmatpush1.bf16.msra.mxu0 %v592
    %615 = vmatprep.subr.bf16.mxu0 0
    %616 = vmatpush1.bf16.msra.mxu0 %v593
    %617 = vmatprep.subr.bf16.mxu0 0
    %618 = vmatpush1.bf16.msra.mxu0 %v594
    %619 = vmatprep.subr.bf16.mxu0 0
    %620 = vmatpush1.bf16.msra.mxu0 0
    %621 = vmatprep.subr.bf16.mxu0 0
    %622 = vmatpush1.bf16.msra.mxu0 0
    %623 = vmatprep.subr.bf16.mxu0 0
    %624 = vmatpush1.bf16.msra.mxu0 0
    %625 = vmatprep.subr.bf16.mxu0 0
    %626 = vmatpush1.bf16.msra.mxu0 0
    %627 = vmatprep.subr.bf16.mxu0 0
    %628 = vmatpush1.bf16.msra.mxu0 0
    %629 = vmatprep.subr.bf16.mxu0 0
    %630 = vmatpush1.bf16.msra.mxu0 0
    %631 = vmatprep.subr.bf16.mxu0 0
    %632 = vmatpush1.bf16.msra.mxu0 0
    %633 = vmatprep.subr.bf16.mxu0 0
    %634 = vmatpush1.bf16.msra.mxu0 0
    %635 = vmatprep.mubr.bf16.mxu0 0
    %636 = vmatmul.mubr.bf16.gmra.mrb[0].mxu0 %v550
    %v637 = vpop.f32.mrb[0].mxu0
    %v638 = vadd.f32 %v554, %v637
    %v639 = vpop.f32.mrb[0].mxu0
    %v640 = vpop.f32.mrb[0].mxu0
    %v641 = vadd.f32 %v554, %v640
    %v642 = vpop.f32.mrb[0].mxu0
    %643 = vdwg.mxu0
    %v644 = vmax.f32 %v638, 0.0
    %v645 = vmax.f32 %v641, 0.0
    %v646 = vadd.f32 %v644, %v645
    %v647 = vrot.slane %v646, 4
    %v648 = vadd.f32 %v646, %v647
    %v649 = vrot.slane %v648, 2
    %v650 = vadd.f32 %v648, %v649
    %v651 = vrot.slane %v650, 1
    %v652 = vadd.f32 %v650, %v651
    %v653 = vmul.f32 %v644, %v644
    %v654 = vmul.f32 %v645, %v645
    %v655 = vadd.f32 %v653, %v654
    %v656 = vrot.slane %v655, 4
    %v657 = vadd.f32 %v655, %v656
    %v658 = vrot.slane %v657, 2
    %v659 = vadd.f32 %v657, %v658
    %v660 = vrot.slane %v659, 1
    %v661 = vadd.f32 %v659, %v660
    %v662 = vmul.f32 %v652, 0.0625
    %v663 = vmul.f32 %v661, 0.0625
    %v664 = vmul.f32 %v662, %v662
    %v665 = vsub.f32 %v663, %v664
    %v666 = vmax.f32 %v665, 0.0
    %v667 = vsub.f32 %v644, %v662
    %v668 = vsub.f32 %v645, %v662
    %v669 = vadd.f32 %v666, 1e-05
    %v670 = vrsqrt.pop %v669
    %v671 = vmul.f32 %v667, %v670
    %v672 = vmul.f32 %v668, %v670
    %v673 = vlaneseq
    %v674 = vshrl.u32 %v673, 7
    %v675 = vsub.s32 0, %v674
    %v676 = vrot.slane %v548, %v675
    %v677 = vmul.f32 %v671, %v676
    %v678 = vmul.f32 %v672, %v676
    %v679 = vlaneseq
    %v680 = vshrl.u32 %v679, 7
    %v681 = vsub.s32 0, %v680
    %v682 = vrot.slane %v549, %v681
    %v683 = vadd.f32 %v677, %v682
    %v684 = vadd.f32 %v678, %v682
    %v685 = vpack.c.bf16 %v684, %v683
    %s686 = scalar_lea.vmem [#allocation2], 256
    %v687 = vld [vmem:[%s686] sm:$0xf]
    %v688 = vld [vmem:[%s686 + $0x4] sm:$0xf]
    %v689 = vld [vmem:[%s686 + $0x8] sm:$0xf]
    %v690 = vld [vmem:[%s686 + $0xc] sm:$0xf]
    %v691 = vld [vmem:[%s686 + $0x10] sm:$0xf]
    %v692 = vld [vmem:[%s686 + $0x14] sm:$0xf]
    %v693 = vld [vmem:[%s686 + $0x18] sm:$0xf]
    %v694 = vld [vmem:[%s686 + $0x1c] sm:$0xf]
    %v695 = vld [vmem:[%s686 + $0x20] sm:$0xf]
    %v696 = vld [vmem:[%s686 + $0x24] sm:$0xf]
    %v697 = vld [vmem:[%s686 + $0x28] sm:$0xf]
    %v698 = vld [vmem:[%s686 + $0x2c] sm:$0xf]
    %v699 = vld [vmem:[%s686 + $0x30] sm:$0xf]
    %v700 = vld [vmem:[%s686 + $0x34] sm:$0xf]
    %v701 = vld [vmem:[%s686 + $0x38] sm:$0xf]
    %v702 = vld [vmem:[%s686 + $0x3c] sm:$0xf]
    %v703 = vld [vmem:[#allocation4 + $0x8] sm:$0x1]
    %v704 = vlaneseq
    %v705 = vshrl.u32 %v704, 7
    %v706 = vsub.s32 0, %v705
    %v707 = vrot.slane %v703, %v706
    %v724 = vunpack.c.l.b16 %v687
    %v725 = vunpack.c.l.b16 %v688
    %v726 = vunpack.c.l.b16 %v689
    %v727 = vunpack.c.l.b16 %v690
    %v728 = vunpack.c.l.b16 %v691
    %v729 = vunpack.c.l.b16 %v692
    %v730 = vunpack.c.l.b16 %v693
    %v731 = vunpack.c.l.b16 %v694
    %v732 = vunpack.c.l.b16 %v695
    %v733 = vunpack.c.l.b16 %v696
    %v734 = vunpack.c.l.b16 %v697
    %v735 = vunpack.c.l.b16 %v698
    %v736 = vunpack.c.l.b16 %v699
    %v737 = vunpack.c.l.b16 %v700
    %v738 = vunpack.c.l.b16 %v701
    %v739 = vunpack.c.l.b16 %v702
    %v740 = vpack.c.b16 %v725, %v724
    %v741 = vpack.c.b16 %v727, %v726
    %v742 = vpack.c.b16 %v729, %v728
    %v743 = vpack.c.b16 %v731, %v730
    %v744 = vpack.c.b16 %v733, %v732
    %v745 = vpack.c.b16 %v735, %v734
    %v746 = vpack.c.b16 %v737, %v736
    %v747 = vpack.c.b16 %v739, %v738
    %756 = vmatprep.subr.bf16.mxu0 0
    %757 = vmatpush1.bf16.msra.mxu0 %v740
    %758 = vmatprep.subr.bf16.mxu0 0
    %759 = vmatpush1.bf16.msra.mxu0 %v741
    %760 = vmatprep.subr.bf16.mxu0 0
    %761 = vmatpush1.bf16.msra.mxu0 %v742
    %762 = vmatprep.subr.bf16.mxu0 0
    %763 = vmatpush1.bf16.msra.mxu0 %v743
    %764 = vmatprep.subr.bf16.mxu0 0
    %765 = vmatpush1.bf16.msra.mxu0 %v744
    %766 = vmatprep.subr.bf16.mxu0 0
    %767 = vmatpush1.bf16.msra.mxu0 %v745
    %768 = vmatprep.subr.bf16.mxu0 0
    %769 = vmatpush1.bf16.msra.mxu0 %v746
    %770 = vmatprep.subr.bf16.mxu0 0
    %771 = vmatpush1.bf16.msra.mxu0 %v747
    %772 = vmatprep.subr.bf16.mxu0 0
    %773 = vmatpush1.bf16.msra.mxu0 0
    %774 = vmatprep.subr.bf16.mxu0 0
    %775 = vmatpush1.bf16.msra.mxu0 0
    %776 = vmatprep.subr.bf16.mxu0 0
    %777 = vmatpush1.bf16.msra.mxu0 0
    %778 = vmatprep.subr.bf16.mxu0 0
    %779 = vmatpush1.bf16.msra.mxu0 0
    %780 = vmatprep.subr.bf16.mxu0 0
    %781 = vmatpush1.bf16.msra.mxu0 0
    %782 = vmatprep.subr.bf16.mxu0 0
    %783 = vmatpush1.bf16.msra.mxu0 0
    %784 = vmatprep.subr.bf16.mxu0 0
    %785 = vmatpush1.bf16.msra.mxu0 0
    %786 = vmatprep.subr.bf16.mxu0 0
    %787 = vmatpush1.bf16.msra.mxu0 0
    %788 = vmatprep.mubr.bf16.mxu0 0
    %789 = vmatmul.mubr.bf16.gmra.mrb[0].mxu0 %v685
    %v790 = vpop.f32.mrb[0].mxu0
    %v791 = vadd.f32 %v707, %v790
    %v792 = vpop.f32.mrb[0].mxu0
    %v793 = vpop.f32.mrb[0].mxu0
    %v794 = vadd.f32 %v707, %v793
    %v795 = vpop.f32.mrb[0].mxu0
    %796 = vdwg.mxu0
    %v797 = vmax.f32 %v791, 0.0
    %v798 = vmax.f32 %v794, 0.0
    %799 = vst [vmem:[%s4] sm:$0xff] %v797
    %800 = vst [vmem:[%s4 + $0x8] sm:$0xff] %v798
    // Predicated region
    $region26: #{gcn_net_forward.1} parent=1 // pred_check
      _
    $region27: #{gcn_net_forward.1} parent=1 // pred_check_branch
      %802 = sbr.rel (0) target = $region29
    $region28: #{gcn_net_forward.1} parent=1 // pred_region
      _
    $region29: #{gcn_net_forward.1} parent=1 // pred_fallthru
      _
    // Predicated region
    $region30: #{gcn_net_forward.1} parent=1 // pred_check
      _
    $region31: #{gcn_net_forward.1} parent=1 // pred_check_branch
      %804 = sbr.rel (0) target = $region33
    $region32: #{gcn_net_forward.1} parent=1 // pred_region
      _
    $region33: #{gcn_net_forward.1} parent=1 // pred_fallthru
      _
    %805 = vsyncpa [#allocation3], 1
    %806 = vsyncpa [#allocation5], 1

</llo_original>
